<compile_context>
chip_gen: v7x
topology: tpu7x:2x2x1
jax: 0.10.0
libtpu: 0.0.40
codegen_flags: <defaults>
</compile_context>

<pallas_src>
import functools

import jax
import jax.numpy as jnp
from jax.experimental import pallas as pl
from jax.experimental.pallas import tpu as pltpu


# ----------------------------- kernel ----------------------------------------

def graphconv_kernel(adj_ref, z_ref, ndst_ref, b_ref, *rest, fuse_next: bool):
    # grid = (dst_tiles, src_tiles); src axis is the reduction ("arbitrary").
    # adj_ref: (tm, tk) bf16 tile of A[dst, src]
    # z_ref:   (tk, H)  bf16 pre-scaled, pre-projected source activations
    if fuse_next:
        nsrc_ref, wnext_ref, out_ref, acc_ref = rest
    else:
        out_ref, acc_ref = rest

    k = pl.program_id(1)

    @pl.when(k == 0)
    def _():
        acc_ref[...] = jnp.zeros_like(acc_ref)

    # hot loop: one bf16 MXU matmul per (dst, src) tile, f32 accumulation
    acc_ref[...] += jnp.dot(adj_ref[...], z_ref[...],
                            preferred_element_type=jnp.float32)

    @pl.when(k == pl.num_programs(1) - 1)
    def _():
        # current layer's epilogue: relu(norm_dst * agg + bias)   (f32, VPU)
        h = jnp.maximum(ndst_ref[...] * acc_ref[...] + b_ref[...], 0.0)
        if fuse_next:
            # emit the NEXT layer's pre-scaled, pre-projected bf16 activation
            hn = (nsrc_ref[...] * h).astype(jnp.bfloat16)
            out_ref[...] = jnp.dot(
                hn, wnext_ref[...],
                preferred_element_type=jnp.float32).astype(jnp.bfloat16)
        else:
            out_ref[...] = h


# ----------------------------- wrappers ---------------------------------------

def _round_up(n, m):
    return ((n + m - 1) // m) * m


def _largest_tile(n, target, unit=128):
    """Largest multiple of `unit` that divides n and is <= min(target, n)."""
    best, t, lim = unit, unit, min(target, n)
    while t <= lim:
        if n % t == 0:
            best = t
        t += unit
    return best


def _gcn_layer(adj_q, z, norm_dst, bias, *, norm_src=None, w_next=None, tm, tk):
    Np, H = z.shape
    fuse = w_next is not None
    grid = (Np // tm, Np // tk)

    in_specs = [
        pl.BlockSpec((tm, tk), lambda i, k: (i, k)),   # adj[dst, src] tile (bf16)
        pl.BlockSpec((tk, H), lambda i, k: (k, 0)),    # z source tile (bf16)
        pl.BlockSpec((tm, 1), lambda i, k: (i, 0)),    # dst-degree norm (f32)
        pl.BlockSpec((1, H), lambda i, k: (0, 0)),     # bias of current layer
    ]
    args = [adj_q, z, norm_dst, bias]
    if fuse:
        in_specs += [
            pl.BlockSpec((tm, 1), lambda i, k: (i, 0)),  # src-norm of dst rows
            pl.BlockSpec((H, H), lambda i, k: (0, 0)),   # next layer's W (bf16)
        ]
        args += [norm_src, w_next]
        out_dtype = jnp.bfloat16
    else:
        out_dtype = jnp.float32

    n_dst = Np // tm
    bytes_accessed = (
        Np * Np * adj_q.dtype.itemsize            # adjacency, read once
        + n_dst * Np * H * z.dtype.itemsize       # z re-streamed per dst tile
        + Np * 4 * (2 if fuse else 1)             # degree-norm vectors
        + H * 4                                    # bias
        + (H * H * 2 if fuse else 0)              # next-layer weight
        + Np * H * (2 if fuse else 4)             # output (bf16 z / f32 h)
    )
    cost = pl.CostEstimate(
        flops=2 * Np * Np * H + (2 * Np * H * H if fuse else 0),
        transcendentals=0,
        bytes_accessed=bytes_accessed,
    )

    return pl.pallas_call(
        functools.partial(graphconv_kernel, fuse_next=fuse),
        out_shape=jax.ShapeDtypeStruct((Np, H), out_dtype),
        grid_spec=pltpu.PrefetchScalarGridSpec(
            num_scalar_prefetch=0,
            grid=grid,
            in_specs=in_specs,
            out_specs=pl.BlockSpec((tm, H), lambda i, k: (i, 0)),
            scratch_shapes=[pltpu.VMEM((tm, H), jnp.float32)],
        ),
        compiler_params=pltpu.CompilerParams(
            dimension_semantics=("parallel", "arbitrary")),
        cost_estimate=cost,
    )(*args)


def gcn_forward(adj, x, params, *, tm_max=512, tk_max=1024):
    """adj: dense adjacency, adj[dst, src] in {0,1}.  x: (N, F_n).  Returns (N, H)."""
    N = x.shape[0]

    # degree normalization hoisted out of the kernels (plain-JAX reductions)
    adj_f32 = adj.astype(jnp.float32)
    norm_dst = jax.lax.rsqrt(jnp.maximum(jnp.sum(adj_f32, axis=1, keepdims=True), 1.0))
    norm_src = jax.lax.rsqrt(jnp.maximum(jnp.sum(adj_f32, axis=0).reshape(N, 1), 1.0))

    # pad node axis to a multiple of 128 (padded rows/cols are inert: zero adj
    # columns, sliced off at the end)
    Np = _round_up(max(N, 128), 128)
    if Np != N:
        pad = Np - N
        adj_f32 = jnp.pad(adj_f32, ((0, pad), (0, pad)))
        x = jnp.pad(x, ((0, pad), (0, 0)))
        norm_dst = jnp.pad(norm_dst, ((0, pad), (0, 0)), constant_values=1.0)
        norm_src = jnp.pad(norm_src, ((0, pad), (0, 0)), constant_values=1.0)

    # decoupled tiles, clamped to divisors of Np; keep >=2 dst tiles so the
    # "parallel" axis still shards across v7x's two TensorCores
    tk = _largest_tile(Np, tk_max)
    tm = _largest_tile(Np, tm_max)
    if Np // tm < 2 and Np >= 256:
        tm = _largest_tile(Np, Np // 2)

    adj_q = adj_f32.astype(jnp.bfloat16)   # 0/1 exact; halves HBM/VMEM bytes

    w1 = params["w_g1"].astype(jnp.bfloat16)
    w2 = params["w_g2"].astype(jnp.bfloat16)
    w3 = params["w_g3"].astype(jnp.bfloat16)

    # node encoder + ReLU and the first layer's projection stay in plain XLA:
    # K = F_n = 8 starves the MXU and the work is trivial (perf review).
    h0 = jnp.maximum(
        jnp.dot(x.astype(jnp.bfloat16), params["w_enc"].astype(jnp.bfloat16),
                preferred_element_type=jnp.float32) + params["b_enc"], 0.0)
    z = jnp.dot((norm_src * h0).astype(jnp.bfloat16), w1,
                preferred_element_type=jnp.float32).astype(jnp.bfloat16)

    # GraphConv 1 & 2: aggregate, relu-epilogue, and emit z_{l+1} (bf16)
    z = _gcn_layer(adj_q, z, norm_dst, params["b_g1"],
                   norm_src=norm_src, w_next=w2, tm=tm, tk=tk)
    z = _gcn_layer(adj_q, z, norm_dst, params["b_g2"],
                   norm_src=norm_src, w_next=w3, tm=tm, tk=tk)
    # GraphConv 3: final layer, purely elementwise epilogue, f32 output
    h = _gcn_layer(adj_q, z, norm_dst, params["b_g3"], tm=tm, tk=tk)
    return h[:N]


def predict_path_success(source_emb, target_emb, params):
    # Perf review: at P ~ 8 pairs a dedicated pallas_call is pure launch
    # overhead and its (P,1) output forces masked partial stores -> plain XLA.
    hi = jax.lax.Precision.HIGHEST
    pe = jnp.concatenate([source_emb, target_emb], axis=-1)
    h = jnp.maximum(jnp.dot(pe, params["w_s1"], precision=hi) + params["b_s1"], 0.0)
    return jax.nn.sigmoid(jnp.dot(h, params["w_s2"], precision=hi) + params["b_s2"])


# ----------------------------- param init ------------------------------------

def _linear_params(key, fan_in, fan_out):
    # PyTorch nn.Linear default init: U(-1/sqrt(fan_in), 1/sqrt(fan_in))
    kw, kb = jax.random.split(key)
    bound = 1.0 / jnp.sqrt(jnp.float32(fan_in))
    w = jax.random.uniform(kw, (fan_in, fan_out), jnp.float32, -bound, bound)
    b = jax.random.uniform(kb, (1, fan_out), jnp.float32, -bound, bound)
    return w, b


def init_params(key, node_feats, edge_feats, hidden_dim):
    keys = jax.random.split(key, 7)
    p = {}
    p["w_enc"], p["b_enc"] = _linear_params(keys[0], node_feats, hidden_dim)
    # edge_encoder: initialized (as in __init__) but unused in forward
    p["w_edge"], p["b_edge"] = _linear_params(keys[1], edge_feats, hidden_dim)
    p["w_g1"], p["b_g1"] = _linear_params(keys[2], hidden_dim, hidden_dim)
    p["w_g2"], p["b_g2"] = _linear_params(keys[3], hidden_dim, hidden_dim)
    p["w_g3"], p["b_g3"] = _linear_params(keys[4], hidden_dim, hidden_dim)
    p["w_s1"], p["b_s1"] = _linear_params(keys[5], 2 * hidden_dim, hidden_dim)
    p["w_s2"], p["b_s2"] = _linear_params(keys[6], hidden_dim, 1)
    return p


# ----------------------------- references (pure JAX) --------------------------

def gcn_forward_ref_matched(adj, x, p):
    # Mirrors the kernel numerics exactly: bf16 MXU operands, f32 accumulation,
    # f32 elementwise, project-before-aggregate with bf16 z activations.
    N = x.shape[0]
    adj_f32 = adj.astype(jnp.float32)
    norm_dst = jax.lax.rsqrt(jnp.maximum(jnp.sum(adj_f32, axis=1, keepdims=True), 1.0))
    norm_src = jax.lax.rsqrt(jnp.maximum(jnp.sum(adj_f32, axis=0).reshape(N, 1), 1.0))
    adj_bf = adj_f32.astype(jnp.bfloat16)

    h = jnp.maximum(
        jnp.dot(x.astype(jnp.bfloat16), p["w_enc"].astype(jnp.bfloat16),
                preferred_element_type=jnp.float32) + p["b_enc"], 0.0)
    z = jnp.dot((norm_src * h).astype(jnp.bfloat16), p["w_g1"].astype(jnp.bfloat16),
                preferred_element_type=jnp.float32).astype(jnp.bfloat16)
    for bias, w_next in ((p["b_g1"], p["w_g2"]),
                         (p["b_g2"], p["w_g3"]),
                         (p["b_g3"], None)):
        agg = jnp.dot(adj_bf, z, preferred_element_type=jnp.float32)
        h = jnp.maximum(norm_dst * agg + bias, 0.0)
        if w_next is not None:
            z = jnp.dot((norm_src * h).astype(jnp.bfloat16),
                        w_next.astype(jnp.bfloat16),
                        preferred_element_type=jnp.float32).astype(jnp.bfloat16)
    return h


def gcn_forward_ref_f32(adj, x, p):
    # Original (un-reassociated) math in full f32 for a loose sanity check.
    hi = jax.lax.Precision.HIGHEST
    N = x.shape[0]
    norm_dst = jax.lax.rsqrt(jnp.maximum(jnp.sum(adj, axis=1, keepdims=True), 1.0))
    norm_src = jax.lax.rsqrt(jnp.maximum(jnp.sum(adj, axis=0).reshape(N, 1), 1.0))
    h = jnp.maximum(jnp.dot(x, p["w_enc"], precision=hi) + p["b_enc"], 0.0)
    for w, b in ((p["w_g1"], p["b_g1"]), (p["w_g2"], p["b_g2"]), (p["w_g3"], p["b_g3"])):
        agg = norm_dst * jnp.dot(adj, norm_src * h, precision=hi)
        h = jnp.maximum(jnp.dot(agg, w, precision=hi) + b, 0.0)
    return h


def path_scorer_ref(src, tgt, p):
    hi = jax.lax.Precision.HIGHEST
    pe = jnp.concatenate([src, tgt], axis=-1)
    h = jnp.maximum(jnp.dot(pe, p["w_s1"], precision=hi) + p["b_s1"], 0.0)
    return jax.nn.sigmoid(jnp.dot(h, p["w_s2"], precision=hi) + p["b_s2"])


# ----------------------------- main -------------------------------------------

if __name__ == "__main__":
    N, NODE_FEATS, EDGE_FEATS, HIDDEN = 256, 8, 8, 128   # HIDDEN=128: lane-dense

    key = jax.random.PRNGKey(0)
    k_adj, k_x, k_e, k_p = jax.random.split(key, 4)

    # random directed graph as dense adjacency A[dst, src] in {0, 1}
    adj = (jax.random.uniform(k_adj, (N, N)) < 0.1).astype(jnp.float32)
    node_feats = jax.random.normal(k_x, (N, NODE_FEATS), jnp.float32)
    edge_feats = jax.random.normal(k_e, (N, EDGE_FEATS), jnp.float32)  # unused in forward

    params = init_params(k_p, NODE_FEATS, EDGE_FEATS, HIDDEN)

    # forward pass (Pallas GraphConv kernels)
    h = jax.block_until_ready(gcn_forward(adj, node_feats, params))
    assert h.shape == (N, HIDDEN)

    # correctness vs. numerics-matched reference (bf16 operands, f32 acc)
    h_ref = gcn_forward_ref_matched(adj, node_feats, params)
    assert jnp.allclose(h, h_ref, atol=1e-3, rtol=1e-3), "forward mismatch (matched ref)"

    # math sanity vs. pure-f32 reference (loose: bf16 MXU feed changes numerics)
    h_f32 = gcn_forward_ref_f32(adj, node_feats, params)
    assert jnp.allclose(h, h_f32, atol=0.1, rtol=0.1), "forward mismatch (f32 ref)"

    # predict_path_success (path_scorer) on a few node-embedding pairs
    src, tgt = h[:8], h[8:16]
    scores = jax.block_until_ready(predict_path_success(src, tgt, params))
    scores_ref = path_scorer_ref(src, tgt, params)
    assert scores.shape == (8, 1)
    assert jnp.allclose(scores, scores_ref, atol=5e-3, rtol=1e-3), "path scorer mismatch"

    print("KERNEL_OK")
</pallas_src>

<mosaic_0001>
module attributes {stable_mosaic.version = 11 : i64} {
  func.func @graphconv_kernel(%arg0: i32, %arg1: i32, %arg2: memref<128x256xbf16, #tpu.memory_space<vmem>>, %arg3: memref<256x128xbf16, #tpu.memory_space<vmem>>, %arg4: memref<128x1xf32, #tpu.memory_space<vmem>>, %arg5: memref<1x128xf32, #tpu.memory_space<vmem>>, %arg6: memref<128x1xf32, #tpu.memory_space<vmem>>, %arg7: memref<128x128xbf16, #tpu.memory_space<vmem>>, %arg8: memref<128x128xbf16, #tpu.memory_space<vmem>>, %arg9: memref<128x128xf32, #tpu.memory_space<vmem>>) attributes {dimension_semantics = [#tpu.dimension_semantics<parallel>, #tpu.dimension_semantics<arbitrary>], iteration_bounds = array<i64: 2, 1>, scalar_prefetch = 0 : i64, scratch_operands = 1 : i64, tpu.core_type = #tpu.core_type<tc>, window_params = [{transform_indices = @transform_0, window_bounds = array<i64: 128, 256>}, {transform_indices = @transform_1, window_bounds = array<i64: 256, 128>}, {transform_indices = @transform_2, window_bounds = array<i64: 128, 1>}, {pipeline_mode = #tpu.pipeline_mode<synchronous>, transform_indices = @transform_3, window_bounds = array<i64: 1, 128>}, {transform_indices = @transform_4, window_bounds = array<i64: 128, 1>}, {pipeline_mode = #tpu.pipeline_mode<synchronous>, transform_indices = @transform_5, window_bounds = array<i64: 128, 128>}, {transform_indices = @transform_6, window_bounds = array<i64: 128, 128>}]} {
    %c0_i32 = arith.constant 0 : i32
    %0 = arith.cmpi eq, %arg1, %c0_i32 : i32
    %1 = arith.extui %0 : i1 to i32
    %c0_i32_0 = arith.constant 0 : i32
    %2 = arith.cmpi ne, %1, %c0_i32_0 : i32
    scf.if %2 {
      %cst_10 = arith.constant 0.000000e+00 : f32
      %12 = vector.broadcast %cst_10 : f32 to vector<128x128xf32>
      %c0_11 = arith.constant 0 : index
      %c0_12 = arith.constant 0 : index
      %13 = vector.load %arg9[%c0_11, %c0_12] : memref<128x128xf32, #tpu.memory_space<vmem>>, vector<128x128xf32>
      tpu.vector_store %arg9[%c0_11, %c0_12], %12 {strides = array<i32>} : memref<128x128xf32, #tpu.memory_space<vmem>>, vector<128x128xf32>,
    } else {
    }
    %c0 = arith.constant 0 : index
    %c0_1 = arith.constant 0 : index
    %3 = vector.load %arg9[%c0, %c0_1] : memref<128x128xf32, #tpu.memory_space<vmem>>, vector<128x128xf32>
    %c0_2 = arith.constant 0 : index
    %c0_3 = arith.constant 0 : index
    %4 = vector.load %arg2[%c0_2, %c0_3] : memref<128x256xbf16, #tpu.memory_space<vmem>>, vector<128x256xbf16>
    %c0_4 = arith.constant 0 : index
    %c0_5 = arith.constant 0 : index
    %5 = vector.load %arg3[%c0_4, %c0_5] : memref<256x128xbf16, #tpu.memory_space<vmem>>, vector<256x128xbf16>
    %cst = arith.constant dense<0.000000e+00> : vector<128x128xf32>
    %6 = tpu.matmul %4, %5, %cst {dimension_numbers = #tpu.dot_dimension_numbers<[1], [0], [0], [1], [0, 0, 1, 1], [], []>} : vector<128x256xbf16>, vector<256x128xbf16>, vector<128x128xf32> -> vector<128x128xf32>
    %7 = arith.addf %3, %6 : vector<128x128xf32>
    %c0_6 = arith.constant 0 : index
    %c0_7 = arith.constant 0 : index
    %8 = vector.load %arg9[%c0_6, %c0_7] : memref<128x128xf32, #tpu.memory_space<vmem>>, vector<128x128xf32>
    tpu.vector_store %arg9[%c0_6, %c0_7], %7 {strides = array<i32>} : memref<128x128xf32, #tpu.memory_space<vmem>>, vector<128x128xf32>,
    %c0_i32_8 = arith.constant 0 : i32
    %9 = arith.cmpi eq, %arg1, %c0_i32_8 : i32
    %10 = arith.extui %9 : i1 to i32
    %c0_i32_9 = arith.constant 0 : i32
    %11 = arith.cmpi ne, %10, %c0_i32_9 : i32
    scf.if %11 {
      %c0_10 = arith.constant 0 : index
      %c0_11 = arith.constant 0 : index
      %12 = vector.load %arg4[%c0_10, %c0_11] : memref<128x1xf32, #tpu.memory_space<vmem>>, vector<128x1xf32>
      %c0_12 = arith.constant 0 : index
      %c0_13 = arith.constant 0 : index
      %13 = vector.load %arg9[%c0_12, %c0_13] : memref<128x128xf32, #tpu.memory_space<vmem>>, vector<128x128xf32>
      %14 = vector.broadcast %12 : vector<128x1xf32> to vector<128x128xf32>
      %15 = arith.mulf %14, %13 : vector<128x128xf32>
      %c0_14 = arith.constant 0 : index
      %c0_15 = arith.constant 0 : index
      %16 = vector.load %arg5[%c0_14, %c0_15] : memref<1x128xf32, #tpu.memory_space<vmem>>, vector<1x128xf32>
      %17 = vector.broadcast %16 : vector<1x128xf32> to vector<128x128xf32>
      %18 = arith.addf %15, %17 : vector<128x128xf32>
      %cst_16 = arith.constant 0.000000e+00 : f32
      %19 = vector.broadcast %cst_16 : f32 to vector<128x128xf32>
      %20 = arith.maximumf %18, %19 : vector<128x128xf32>
      %c0_17 = arith.constant 0 : index
      %c0_18 = arith.constant 0 : index
      %21 = vector.load %arg6[%c0_17, %c0_18] : memref<128x1xf32, #tpu.memory_space<vmem>>, vector<128x1xf32>
      %22 = vector.broadcast %21 : vector<128x1xf32> to vector<128x128xf32>
      %23 = arith.mulf %22, %20 : vector<128x128xf32>
      %24 = arith.truncf %23 : vector<128x128xf32> to vector<128x128xbf16>
      %c0_19 = arith.constant 0 : index
      %c0_20 = arith.constant 0 : index
      %25 = vector.load %arg7[%c0_19, %c0_20] : memref<128x128xbf16, #tpu.memory_space<vmem>>, vector<128x128xbf16>
      %cst_21 = arith.constant dense<0.000000e+00> : vector<128x128xf32>
      %26 = tpu.matmul %24, %25, %cst_21 {dimension_numbers = #tpu.dot_dimension_numbers<[1], [0], [0], [1], [0, 0, 1, 1], [], []>} : vector<128x128xbf16>, vector<128x128xbf16>, vector<128x128xf32> -> vector<128x128xf32>
      %27 = arith.truncf %26 : vector<128x128xf32> to vector<128x128xbf16>
      %c0_22 = arith.constant 0 : index
      %c0_23 = arith.constant 0 : index
      %28 = vector.load %arg8[%c0_22, %c0_23] : memref<128x128xbf16, #tpu.memory_space<vmem>>, vector<128x128xbf16>
      tpu.vector_store %arg8[%c0_22, %c0_23], %27 {strides = array<i32>} : memref<128x128xbf16, #tpu.memory_space<vmem>>, vector<128x128xbf16>,
    } else {
    }
    return
  }
  func.func @transform_0(%arg0: i32, %arg1: i32) -> (i32, i32) {
    %c0_i32 = arith.constant 0 : i32
    return %arg0, %arg1 : i32, i32
  }
  func.func @transform_1(%arg0: i32, %arg1: i32) -> (i32, i32) {
    %c0_i32 = arith.constant 0 : i32
    %c0_i32_0 = arith.constant 0 : i32
    return %arg1, %c0_i32 : i32, i32
  }
  func.func @transform_2(%arg0: i32, %arg1: i32) -> (i32, i32) {
    %c0_i32 = arith.constant 0 : i32
    %c0_i32_0 = arith.constant 0 : i32
    return %arg0, %c0_i32 : i32, i32
  }
  func.func @transform_3(%arg0: i32, %arg1: i32) -> (i32, i32) {
    %c0_i32 = arith.constant 0 : i32
    %c0_i32_0 = arith.constant 0 : i32
    %c0_i32_1 = arith.constant 0 : i32
    return %c0_i32, %c0_i32_0 : i32, i32
  }
  func.func @transform_4(%arg0: i32, %arg1: i32) -> (i32, i32) {
    %c0_i32 = arith.constant 0 : i32
    %c0_i32_0 = arith.constant 0 : i32
    return %arg0, %c0_i32 : i32, i32
  }
  func.func @transform_5(%arg0: i32, %arg1: i32) -> (i32, i32) {
    %c0_i32 = arith.constant 0 : i32
    %c0_i32_0 = arith.constant 0 : i32
    %c0_i32_1 = arith.constant 0 : i32
    return %c0_i32, %c0_i32_0 : i32, i32
  }
  func.func @transform_6(%arg0: i32, %arg1: i32) -> (i32, i32) {
    %c0_i32 = arith.constant 0 : i32
    %c0_i32_0 = arith.constant 0 : i32
    return %arg0, %c0_i32 : i32, i32
  }
}

</mosaic_0001>

<llo_original>
// kernel: tpu_custom_call.1
$region0: #{tpu_custom_call.1}
  #allocation0 [shape = 'u32[]', space=smem, size = 0x4, offset = 0x4, fixed_abs, tag = 'smem constant byte address 0x4 - core index']
  #allocation1 [shape = 'u32[144,128]{1,0:T(1,128)}', space=vmem, size = 0x12000, scoped, tag = 'internal scratch']
  #allocation2 [shape = 'f32[128,128]{1,0:T(8,128)}', space=vmem, size = 0x10000, scoped, tag = 'scratch operand']
  %s0 = inlined_call_operand.vmem [shape: bf16[256,256], index: 0, kind: input, shape index: {}]
  %s1 = inlined_call_operand.vmem [shape: bf16[256,128], index: 1, kind: input, shape index: {}]
  %s2 = inlined_call_operand.vmem [shape: f32[256,1], index: 2, kind: input, shape index: {}]
  %s3 = inlined_call_operand.vmem [shape: f32[1,128], index: 3, kind: input, shape index: {}]
  %s4 = inlined_call_operand.vmem [shape: f32[256,1], index: 4, kind: input, shape index: {}]
  %s5 = inlined_call_operand.vmem [shape: bf16[128,128], index: 5, kind: input, shape index: {}]
  %s6 = inlined_call_operand.hbm [shape: bf16[256,128], index: 6, kind: output, shape index: {}]
  %s7 = sld [smem:[#allocation0]]
  $region65: #{tpu_custom_call.1} parent=0
    _
  %s9 = ssub.s32 1, %s7
  %s10 = scalar_select 0, %s9, %s7
  $region1: #{tpu_custom_call.1} parent=0
    #allocation3 [shape = 'u8[65536]{0}', space=vmem, size = 0x10000, scoped, tag = 'output window, operand 0']
    #allocation4 [shape = 's32[2]{0}', space=sflag, size = 0x8, scoped, tag = 'scoped memory for tpu_custom_call.1']
    %11 = vsyncpa [#allocation4], 0
    %s12 = scalar_lea.sflag [#allocation4], 1
    %13 = vsyncpa %s12, 0
    loop: start=0, step=1, limit=4
    $region2: #{tpu_custom_call.1} parent=1 // loop_pre_header
      _
    $region3: #{tpu_custom_call.1} parent=1 // loop_header
      %s15 = sphi 0, %s19
      %p16 = scmp.ge.s32.totalorder %s15, 4
      %s22 = sphi 0, %s34
      %s23 = sphi 0, %s30
      %s24 = sphi 0, %s22
      %s25 = sphi 0, %s23
      %s26 = sphi 0, %s24
      %s27 = sphi 0, %s25
      %s39 = sphi 0, %s41
      %s42 = sphi 0, %s39
      %s43 = sphi 0, %s42
      %s59 = sphi 0, %s43
      %s65 = sphi 0, %s67
      %s68 = sphi 0, %s65
      %s69 = sphi 0, %s68
      %s85 = sphi 0, %s69
      %s91 = sphi 0, %s93
      %s94 = sphi 0, %s91
      %s95 = sphi 0, %s94
      %s111 = sphi 0, %s95
      %s115 = sphi 0, %s115
      %s117 = sphi 0, %s115
      %s118 = sphi 0, %s117
      %s132 = sphi 0, %s118
      %s138 = sphi 0, %s140
      %s141 = sphi 0, %s138
      %s142 = sphi 0, %s141
      %s158 = sphi 0, %s142
      %s162 = sphi 0, %s162
      %s164 = sphi 0, %s162
      %s165 = sphi 0, %s164
      %s179 = sphi 0, %s165
      %s185 = sphi 0, %s187
      %s188 = sphi 0, %s185
      %s189 = sphi 0, %s188
      %s205 = sphi 0, %s189
    $region4: #{tpu_custom_call.1} parent=1 // loop_header_branch
      %18 = sbr.rel (%p16) target = $region8
    $region5: #{tpu_custom_call.1} parent=1 // loop_body
      %s20 = ssub.s32 %s15, 1
      %s21 = ssub.s32 %s15, 2
      %s28 = sadd.s32 1, %s23
      %p29 = scmp.ge.s32.totalorder %s28, 1
      %s30 = scalar_select %p29, 0, %s28
      %s31 = sadd.s32 1, %s22
      %s32 = scalar_select %p29, %s31, %s22
      %p33 = scmp.ge.s32.totalorder %s32, 2
      %s34 = scalar_select %p33, 0, %s32
      %s35 = ssub.s32 %s22, %s34
      %s36 = ssub.s32 %s23, %s30
      %s37 = sor.u32 %s35, %s36
      %p38 = scmp.eq.s32.totalorder %s37, 0
      %s40 = sadd.s32 %s39, 1
      %s41 = scalar_select %p38, %s39, %s40
      %p44 = pneg %p38
      %p45 = scmp.eq.s32.totalorder %s15, 1
      %p46 = por %p44, %p45
      %p47 = scmp.ne.s32.totalorder %s39, %s42
      %p48 = scmp.eq.s32.totalorder %s15, 0
      %p49 = por %p47, %p48
      %p50 = scmp.ne.s32.totalorder %s39, %s42
      %p51 = scmp.eq.s32.totalorder %s20, 1
      %p52 = por %p50, %p51
      %p53 = scmp.ne.s32.totalorder %s42, %s43
      %p54 = scmp.eq.s32.totalorder %s20, 0
      %p55 = por %p53, %p54
      %p56 = scmp.ne.s32.totalorder %s42, %s43
      %p57 = scmp.eq.s32.totalorder %s21, 1
      %p58 = por %p56, %p57
      %p60 = scmp.ne.s32.totalorder %s43, %s59
      %p61 = scmp.eq.s32.totalorder %s21, 0
      %p62 = por %p60, %p61
      %s63 = ssub.s32 %s23, %s30
      %p64 = scmp.eq.s32.totalorder %s63, 0
      %s66 = sadd.s32 %s65, 1
      %s67 = scalar_select %p64, %s65, %s66
      %p70 = pneg %p64
      %p71 = scmp.eq.s32.totalorder %s15, 1
      %p72 = por %p70, %p71
      %p73 = scmp.ne.s32.totalorder %s65, %s68
      %p74 = scmp.eq.s32.totalorder %s15, 0
      %p75 = por %p73, %p74
      %p76 = scmp.ne.s32.totalorder %s65, %s68
      %p77 = scmp.eq.s32.totalorder %s20, 1
      %p78 = por %p76, %p77
      %p79 = scmp.ne.s32.totalorder %s68, %s69
      %p80 = scmp.eq.s32.totalorder %s20, 0
      %p81 = por %p79, %p80
      %p82 = scmp.ne.s32.totalorder %s68, %s69
      %p83 = scmp.eq.s32.totalorder %s21, 1
      %p84 = por %p82, %p83
      %p86 = scmp.ne.s32.totalorder %s69, %s85
      %p87 = scmp.eq.s32.totalorder %s21, 0
      %p88 = por %p86, %p87
      %s89 = ssub.s32 %s22, %s34
      %p90 = scmp.eq.s32.totalorder %s89, 0
      %s92 = sadd.s32 %s91, 1
      %s93 = scalar_select %p90, %s91, %s92
      %p96 = pneg %p90
      %p97 = scmp.eq.s32.totalorder %s15, 1
      %p98 = por %p96, %p97
      %p99 = scmp.ne.s32.totalorder %s91, %s94
      %p100 = scmp.eq.s32.totalorder %s15, 0
      %p101 = por %p99, %p100
      %p102 = scmp.ne.s32.totalorder %s91, %s94
      %p103 = scmp.eq.s32.totalorder %s20, 1
      %p104 = por %p102, %p103
      %p105 = scmp.ne.s32.totalorder %s94, %s95
      %p106 = scmp.eq.s32.totalorder %s20, 0
      %p107 = por %p105, %p106
      %p108 = scmp.ne.s32.totalorder %s94, %s95
      %p109 = scmp.eq.s32.totalorder %s21, 1
      %p110 = por %p108, %p109
      %p112 = scmp.ne.s32.totalorder %s95, %s111
      %p113 = scmp.eq.s32.totalorder %s21, 0
      %p114 = por %p112, %p113
      %s116 = sadd.s32 %s115, 1
      %p119 = scmp.eq.s32.totalorder %s15, 1
      %p120 = scmp.ne.s32.totalorder %s115, %s117
      %p121 = scmp.eq.s32.totalorder %s15, 0
      %p122 = por %p120, %p121
      %p123 = scmp.ne.s32.totalorder %s115, %s117
      %p124 = scmp.eq.s32.totalorder %s20, 1
      %p125 = por %p123, %p124
      %p126 = scmp.ne.s32.totalorder %s117, %s118
      %p127 = scmp.eq.s32.totalorder %s20, 0
      %p128 = por %p126, %p127
      %p129 = scmp.ne.s32.totalorder %s117, %s118
      %p130 = scmp.eq.s32.totalorder %s21, 1
      %p131 = por %p129, %p130
      %p133 = scmp.ne.s32.totalorder %s118, %s132
      %p134 = scmp.eq.s32.totalorder %s21, 0
      %p135 = por %p133, %p134
      %s136 = ssub.s32 %s22, %s34
      %p137 = scmp.eq.s32.totalorder %s136, 0
      %s139 = sadd.s32 %s138, 1
      %s140 = scalar_select %p137, %s138, %s139
      %p143 = pneg %p137
      %p144 = scmp.eq.s32.totalorder %s15, 1
      %p145 = por %p143, %p144
      %p146 = scmp.ne.s32.totalorder %s138, %s141
      %p147 = scmp.eq.s32.totalorder %s15, 0
      %p148 = por %p146, %p147
      %p149 = scmp.ne.s32.totalorder %s138, %s141
      %p150 = scmp.eq.s32.totalorder %s20, 1
      %p151 = por %p149, %p150
      %p152 = scmp.ne.s32.totalorder %s141, %s142
      %p153 = scmp.eq.s32.totalorder %s20, 0
      %p154 = por %p152, %p153
      %p155 = scmp.ne.s32.totalorder %s141, %s142
      %p156 = scmp.eq.s32.totalorder %s21, 1
      %p157 = por %p155, %p156
      %p159 = scmp.ne.s32.totalorder %s142, %s158
      %p160 = scmp.eq.s32.totalorder %s21, 0
      %p161 = por %p159, %p160
      %s163 = sadd.s32 %s162, 1
      %p166 = scmp.eq.s32.totalorder %s15, 1
      %p167 = scmp.ne.s32.totalorder %s162, %s164
      %p168 = scmp.eq.s32.totalorder %s15, 0
      %p169 = por %p167, %p168
      %p170 = scmp.ne.s32.totalorder %s162, %s164
      %p171 = scmp.eq.s32.totalorder %s20, 1
      %p172 = por %p170, %p171
      %p173 = scmp.ne.s32.totalorder %s164, %s165
      %p174 = scmp.eq.s32.totalorder %s20, 0
      %p175 = por %p173, %p174
      %p176 = scmp.ne.s32.totalorder %s164, %s165
      %p177 = scmp.eq.s32.totalorder %s21, 1
      %p178 = por %p176, %p177
      %p180 = scmp.ne.s32.totalorder %s165, %s179
      %p181 = scmp.eq.s32.totalorder %s21, 0
      %p182 = por %p180, %p181
      %s183 = ssub.s32 %s22, %s34
      %p184 = scmp.eq.s32.totalorder %s183, 0
      %s186 = sadd.s32 %s185, 1
      %s187 = scalar_select %p184, %s185, %s186
      %p190 = pneg %p184
      %p191 = scmp.eq.s32.totalorder %s15, 1
      %p192 = por %p190, %p191
      %p193 = scmp.ne.s32.totalorder %s185, %s188
      %p194 = scmp.eq.s32.totalorder %s15, 0
      %p195 = por %p193, %p194
      %p196 = scmp.ne.s32.totalorder %s185, %s188
      %p197 = scmp.eq.s32.totalorder %s20, 1
      %p198 = por %p196, %p197
      %p199 = scmp.ne.s32.totalorder %s188, %s189
      %p200 = scmp.eq.s32.totalorder %s20, 0
      %p201 = por %p199, %p200
      %p202 = scmp.ne.s32.totalorder %s188, %s189
      %p203 = scmp.eq.s32.totalorder %s21, 1
      %p204 = por %p202, %p203
      %p206 = scmp.ne.s32.totalorder %s189, %s205
      %p207 = scmp.eq.s32.totalorder %s21, 0
      %p208 = por %p206, %p207
      %p209 = scmp.le.s32.totalorder 1, %s15
      %p210 = scmp.lt.s32.totalorder %s15, 3
      %p211 = pnand %p209, %p210
      %p212 = pneg %p211
      // Predicated region
      $region9: #{tpu_custom_call.1} parent=5 // pred_check
        _
      $region10: #{tpu_custom_call.1} parent=5 // pred_check_branch
        %214 = sbr.rel (%p211) target = $region12
      $region11: #{tpu_custom_call.1} parent=5 // pred_region
        %s215 = ssub.s32 %s15, 1
        // Predicated region
        $region13: #{tpu_custom_call.1} parent=11 // pred_check
          %p216 = pneg %p81
        $region14: #{tpu_custom_call.1} parent=11 // pred_check_branch
          %218 = sbr.rel (%p216) target = $region16
        $region15: #{tpu_custom_call.1} parent=11 // pred_region
          %s219 = smul.u32 32, %s25
          %p220 = scmp.lt.s32.totalorder %s219, 31
          %s221 = scalar_select %p220, %s219, 31
          %s222 = smul.addr %s221, 4
          %s223 = scalar_lea.vmem %s1, %s222
          %s224 = smul.u32 32, %s25
        $region16: #{tpu_custom_call.1} parent=11 // pred_fallthru
          _
        // Predicated region
        $region17: #{tpu_custom_call.1} parent=11 // pred_check
          %p225 = pneg %p128
        $region18: #{tpu_custom_call.1} parent=11 // pred_check_branch
          %227 = sbr.rel (%p225) target = $region20
        $region19: #{tpu_custom_call.1} parent=11 // pred_region
          _
        $region20: #{tpu_custom_call.1} parent=11 // pred_fallthru
          _
        // Predicated region
        $region21: #{tpu_custom_call.1} parent=11 // pred_check
          %p228 = pneg %p175
        $region22: #{tpu_custom_call.1} parent=11 // pred_check_branch
          %230 = sbr.rel (%p228) target = $region24
        $region23: #{tpu_custom_call.1} parent=11 // pred_region
          _
        $region24: #{tpu_custom_call.1} parent=11 // pred_fallthru
          _
      $region12: #{tpu_custom_call.1} parent=5 // pred_fallthru
        _
      %p231 = scmp.lt.s32.totalorder %s15, 2
      // Predicated region
      $region25: #{tpu_custom_call.1} parent=5 // pred_check
        %p232 = pneg %p231
      $region26: #{tpu_custom_call.1} parent=5 // pred_check_branch
        %234 = sbr.rel (%p232) target = $region28
      $region27: #{tpu_custom_call.1} parent=5 // pred_region
        // Predicated region
        $region29: #{tpu_custom_call.1} parent=27 // pred_check
          %p235 = pneg %p49
        $region30: #{tpu_custom_call.1} parent=27 // pred_check_branch
          %237 = sbr.rel (%p235) target = $region32
        $region31: #{tpu_custom_call.1} parent=27 // pred_region
          %s238 = smul.u32 16, %s22
          %s239 = smul.u32 2, %s23
          %p240 = scmp.lt.s32.totalorder %s238, 31
          %s241 = scalar_select %p240, %s238, 31
          %p242 = scmp.lt.s32.totalorder %s239, 1
          %s243 = scalar_select %p242, %s239, 1
          %s244 = smul.addr %s241, 2
          %s245 = sadd.s32 %s243, %s244
          %s246 = smul.addr %s245, 4
          %s247 = scalar_lea.vmem %s0, %s246
          %s248 = smul.u32 16, %s22
          %s249 = smul.u32 2, %s23
        $region32: #{tpu_custom_call.1} parent=27 // pred_fallthru
          _
        // Predicated region
        $region33: #{tpu_custom_call.1} parent=27 // pred_check
          %p250 = pneg %p101
        $region34: #{tpu_custom_call.1} parent=27 // pred_check_branch
          %252 = sbr.rel (%p250) target = $region36
        $region35: #{tpu_custom_call.1} parent=27 // pred_region
          %s253 = smul.u32 16, %s22
          %p254 = scmp.lt.s32.totalorder %s253, 31
          %s255 = scalar_select %p254, %s253, 31
          %s256 = smul.addr %s255, 8
          %s257 = scalar_lea.vmem %s2, %s256
          %s258 = smul.u32 16, %s22
        $region36: #{tpu_custom_call.1} parent=27 // pred_fallthru
          _
        // Predicated region
        $region37: #{tpu_custom_call.1} parent=27 // pred_check
          %p259 = pneg %p148
        $region38: #{tpu_custom_call.1} parent=27 // pred_check_branch
          %261 = sbr.rel (%p259) target = $region40
        $region39: #{tpu_custom_call.1} parent=27 // pred_region
          %s262 = smul.u32 16, %s22
          %p263 = scmp.lt.s32.totalorder %s262, 31
          %s264 = scalar_select %p263, %s262, 31
          %s265 = smul.addr %s264, 8
          %s266 = scalar_lea.vmem %s4, %s265
          %s267 = smul.u32 16, %s22
        $region40: #{tpu_custom_call.1} parent=27 // pred_fallthru
          _
      $region28: #{tpu_custom_call.1} parent=5 // pred_fallthru
        _
      %p268 = scmp.le.s32.totalorder 1, %s15
      %p269 = scmp.lt.s32.totalorder %s15, 3
      %p270 = pnand %p268, %p269
      %p271 = pneg %p270
      // Predicated region
      $region41: #{tpu_custom_call.1} parent=5 // pred_check
        _
      $region42: #{tpu_custom_call.1} parent=5 // pred_check_branch
        %273 = sbr.rel (%p270) target = $region44
      $region43: #{tpu_custom_call.1} parent=5 // pred_region
        %s274 = ssub.s32 %s15, 1
        %s275 = smul.u32 16, %s24
        %s276 = smul.u32 2, %s25
        %p277 = scmp.lt.s32.totalorder %s275, 31
        %s278 = scalar_select %p277, %s275, 31
        %p279 = scmp.lt.s32.totalorder %s276, 1
        %s280 = scalar_select %p279, %s276, 1
        %s281 = smul.addr %s278, 2
        %s282 = sadd.s32 %s280, %s281
        %s283 = smul.addr %s282, 4
        %s284 = scalar_lea.vmem %s0, %s283
        %p285 = pneg %p55
        %p286 = pneg %p52
        %s287 = smul.u32 32, %s25
        %p288 = scmp.lt.s32.totalorder %s287, 31
        %s289 = scalar_select %p288, %s287, 31
        %s290 = smul.addr %s289, 4
        %s291 = scalar_lea.vmem %s1, %s290
        %p292 = pneg %p81
        %p293 = pneg %p78
        %s294 = smul.u32 16, %s24
        %p295 = scmp.lt.s32.totalorder %s294, 31
        %s296 = scalar_select %p295, %s294, 31
        %s297 = smul.addr %s296, 8
        %s298 = scalar_lea.vmem %s2, %s297
        %p299 = pneg %p107
        %p300 = pneg %p104
        %p301 = pneg %p128
        %p302 = pneg %p125
        %s303 = smul.u32 16, %s24
        %p304 = scmp.lt.s32.totalorder %s303, 31
        %s305 = scalar_select %p304, %s303, 31
        %s306 = smul.addr %s305, 8
        %s307 = scalar_lea.vmem %s4, %s306
        %p308 = pneg %p154
        %p309 = pneg %p151
        %p310 = pneg %p175
        %p311 = pneg %p172
        %p312 = pneg %p201
        %p313 = pneg %p198
        %s314 = sand.u32 %s188, 1
        %s315 = scalar_lea.sflag [#allocation4], %s314
        %s316 = sand.u32 %s188, 1
        %s317 = smul.addr %s316, 64
        %s318 = scalar_lea.vmem [#allocation3], %s317
        %s319 = smul.u32 16, %s24
        %s320 = smul.u32 2, %s25
        %p321 = scmp.lt.s32.totalorder %s319, 31
        %s322 = scalar_select %p321, %s319, 31
        %p323 = scmp.lt.s32.totalorder %s320, 1
        %s324 = scalar_select %p323, %s320, 1
        %s325 = smul.addr %s322, 2
        %s326 = sadd.s32 %s324, %s325
        %s327 = smul.addr %s326, 4
        %s328 = scalar_lea.vmem %s0, %s327
        %s329 = smul.u32 16, %s24
        %s330 = smul.u32 2, %s25
        %s331 = smul.u32 32, %s25
        %p332 = scmp.lt.s32.totalorder %s331, 31
        %s333 = scalar_select %p332, %s331, 31
        %s334 = smul.addr %s333, 4
        %s335 = scalar_lea.vmem %s1, %s334
        %s336 = smul.u32 32, %s25
        %s337 = smul.u32 16, %s24
        %p338 = scmp.lt.s32.totalorder %s337, 31
        %s339 = scalar_select %p338, %s337, 31
        %s340 = smul.addr %s339, 8
        %s341 = scalar_lea.vmem %s2, %s340
        %s342 = smul.u32 16, %s24
        %s343 = smul.u32 16, %s24
        %p344 = scmp.lt.s32.totalorder %s343, 31
        %s345 = scalar_select %p344, %s343, 31
        %s346 = smul.addr %s345, 8
        %s347 = scalar_lea.vmem %s4, %s346
        %s348 = smul.u32 16, %s24
        %s349 = smul.u32 16, %s24
        %p351 = scmp.eq.s32.totalorder %s25, 0
        // Predicated region
        $region45: #{tpu_custom_call.1} parent=43 // pred_check
          %p352 = pneg %p351
        $region46: #{tpu_custom_call.1} parent=43 // pred_check_branch
          %354 = sbr.rel (%p352) target = $region48
        $region47: #{tpu_custom_call.1} parent=43 // pred_region
          %355 = vst [vmem:[#allocation2] sm:$0xff] 0.0
          %356 = vst [vmem:[#allocation2 + $0x8] sm:$0xff] 0.0
          %357 = vst [vmem:[#allocation2 + $0x10] sm:$0xff] 0.0
          %358 = vst [vmem:[#allocation2 + $0x18] sm:$0xff] 0.0
          %359 = vst [vmem:[#allocation2 + $0x20] sm:$0xff] 0.0
          %360 = vst [vmem:[#allocation2 + $0x28] sm:$0xff] 0.0
          %361 = vst [vmem:[#allocation2 + $0x30] sm:$0xff] 0.0
          %362 = vst [vmem:[#allocation2 + $0x38] sm:$0xff] 0.0
          %363 = vst [vmem:[#allocation2 + $0x40] sm:$0xff] 0.0
          %364 = vst [vmem:[#allocation2 + $0x48] sm:$0xff] 0.0
          %365 = vst [vmem:[#allocation2 + $0x50] sm:$0xff] 0.0
          %366 = vst [vmem:[#allocation2 + $0x58] sm:$0xff] 0.0
          %367 = vst [vmem:[#allocation2 + $0x60] sm:$0xff] 0.0
          %368 = vst [vmem:[#allocation2 + $0x68] sm:$0xff] 0.0
          %369 = vst [vmem:[#allocation2 + $0x70] sm:$0xff] 0.0
          %370 = vst [vmem:[#allocation2 + $0x78] sm:$0xff] 0.0
        $region48: #{tpu_custom_call.1} parent=43 // pred_fallthru
          _
        %v371 = vld [vmem:[#allocation2] sm:$0xff]
        %v372 = vld [vmem:[#allocation2 + $0x8] sm:$0xff]
        %v373 = vld [vmem:[#allocation2 + $0x10] sm:$0xff]
        %v374 = vld [vmem:[#allocation2 + $0x18] sm:$0xff]
        %v375 = vld [vmem:[#allocation2 + $0x20] sm:$0xff]
        %v376 = vld [vmem:[#allocation2 + $0x28] sm:$0xff]
        %v377 = vld [vmem:[#allocation2 + $0x30] sm:$0xff]
        %v378 = vld [vmem:[#allocation2 + $0x38] sm:$0xff]
        %v379 = vld [vmem:[#allocation2 + $0x40] sm:$0xff]
        %v380 = vld [vmem:[#allocation2 + $0x48] sm:$0xff]
        %v381 = vld [vmem:[#allocation2 + $0x50] sm:$0xff]
        %v382 = vld [vmem:[#allocation2 + $0x58] sm:$0xff]
        %v383 = vld [vmem:[#allocation2 + $0x60] sm:$0xff]
        %v384 = vld [vmem:[#allocation2 + $0x68] sm:$0xff]
        %v385 = vld [vmem:[#allocation2 + $0x70] sm:$0xff]
        %v386 = vld [vmem:[#allocation2 + $0x78] sm:$0xff]
        %v387 = vld [vmem:[%s328] sm:$0xff]
        %v388 = vld [vmem:[%s328 + $0x8] sm:$0xff]
        %v389 = vld [vmem:[%s328 + $0x10] sm:$0xff]
        %v390 = vld [vmem:[%s328 + $0x18] sm:$0xff]
        %v391 = vld [vmem:[%s328 + $0x20] sm:$0xff]
        %v392 = vld [vmem:[%s328 + $0x28] sm:$0xff]
        %v393 = vld [vmem:[%s328 + $0x30] sm:$0xff]
        %v394 = vld [vmem:[%s328 + $0x38] sm:$0xff]
        %v395 = vld [vmem:[%s328 + $0x40] sm:$0xff]
        %v396 = vld [vmem:[%s328 + $0x48] sm:$0xff]
        %v397 = vld [vmem:[%s328 + $0x50] sm:$0xff]
        %v398 = vld [vmem:[%s328 + $0x58] sm:$0xff]
        %v399 = vld [vmem:[%s328 + $0x60] sm:$0xff]
        %v400 = vld [vmem:[%s328 + $0x68] sm:$0xff]
        %v401 = vld [vmem:[%s328 + $0x70] sm:$0xff]
        %v402 = vld [vmem:[%s328 + $0x78] sm:$0xff]
        %v403 = vld [vmem:[%s335] sm:$0xf]
        %v404 = vld [vmem:[%s335 + $0x4] sm:$0xf]
        %v405 = vld [vmem:[%s335 + $0x8] sm:$0xf]
        %v406 = vld [vmem:[%s335 + $0xc] sm:$0xf]
        %v407 = vld [vmem:[%s335 + $0x10] sm:$0xf]
        %v408 = vld [vmem:[%s335 + $0x14] sm:$0xf]
        %v409 = vld [vmem:[%s335 + $0x18] sm:$0xf]
        %v410 = vld [vmem:[%s335 + $0x1c] sm:$0xf]
        %v411 = vld [vmem:[%s335 + $0x20] sm:$0xf]
        %v412 = vld [vmem:[%s335 + $0x24] sm:$0xf]
        %v413 = vld [vmem:[%s335 + $0x28] sm:$0xf]
        %v414 = vld [vmem:[%s335 + $0x2c] sm:$0xf]
        %v415 = vld [vmem:[%s335 + $0x30] sm:$0xf]
        %v416 = vld [vmem:[%s335 + $0x34] sm:$0xf]
        %v417 = vld [vmem:[%s335 + $0x38] sm:$0xf]
        %v418 = vld [vmem:[%s335 + $0x3c] sm:$0xf]
        %v419 = vld [vmem:[%s335 + $0x40] sm:$0xf]
        %v420 = vld [vmem:[%s335 + $0x44] sm:$0xf]
        %v421 = vld [vmem:[%s335 + $0x48] sm:$0xf]
        %v422 = vld [vmem:[%s335 + $0x4c] sm:$0xf]
        %v423 = vld [vmem:[%s335 + $0x50] sm:$0xf]
        %v424 = vld [vmem:[%s335 + $0x54] sm:$0xf]
        %v425 = vld [vmem:[%s335 + $0x58] sm:$0xf]
        %v426 = vld [vmem:[%s335 + $0x5c] sm:$0xf]
        %v427 = vld [vmem:[%s335 + $0x60] sm:$0xf]
        %v428 = vld [vmem:[%s335 + $0x64] sm:$0xf]
        %v429 = vld [vmem:[%s335 + $0x68] sm:$0xf]
        %v430 = vld [vmem:[%s335 + $0x6c] sm:$0xf]
        %v431 = vld [vmem:[%s335 + $0x70] sm:$0xf]
        %v432 = vld [vmem:[%s335 + $0x74] sm:$0xf]
        %v433 = vld [vmem:[%s335 + $0x78] sm:$0xf]
        %v434 = vld [vmem:[%s335 + $0x7c] sm:$0xf]
        %v451 = vunpack.c.l.b16 %v387
        %v452 = vunpack.c.h.b16 %v387
        %v453 = vunpack.c.l.b16 %v388
        %v454 = vunpack.c.h.b16 %v388
        %v455 = vunpack.c.l.b16 %v389
        %v456 = vunpack.c.h.b16 %v389
        %v457 = vunpack.c.l.b16 %v390
        %v458 = vunpack.c.h.b16 %v390
        %v459 = vunpack.c.l.b16 %v391
        %v460 = vunpack.c.h.b16 %v391
        %v461 = vunpack.c.l.b16 %v392
        %v462 = vunpack.c.h.b16 %v392
        %v463 = vunpack.c.l.b16 %v393
        %v464 = vunpack.c.h.b16 %v393
        %v465 = vunpack.c.l.b16 %v394
        %v466 = vunpack.c.h.b16 %v394
        %v467 = vunpack.c.l.b16 %v395
        %v468 = vunpack.c.h.b16 %v395
        %v469 = vunpack.c.l.b16 %v396
        %v470 = vunpack.c.h.b16 %v396
        %v471 = vunpack.c.l.b16 %v397
        %v472 = vunpack.c.h.b16 %v397
        %v473 = vunpack.c.l.b16 %v398
        %v474 = vunpack.c.h.b16 %v398
        %v475 = vunpack.c.l.b16 %v399
        %v476 = vunpack.c.h.b16 %v399
        %v477 = vunpack.c.l.b16 %v400
        %v478 = vunpack.c.h.b16 %v400
        %v479 = vunpack.c.l.b16 %v401
        %v480 = vunpack.c.h.b16 %v401
        %v481 = vunpack.c.l.b16 %v402
        %v482 = vunpack.c.h.b16 %v402
        %v483 = vpack.c.b16 %v453, %v451
        %v484 = vpack.c.b16 %v454, %v452
        %v485 = vpack.c.b16 %v457, %v455
        %v486 = vpack.c.b16 %v458, %v456
        %v487 = vpack.c.b16 %v461, %v459
        %v488 = vpack.c.b16 %v462, %v460
        %v489 = vpack.c.b16 %v465, %v463
        %v490 = vpack.c.b16 %v466, %v464
        %v491 = vpack.c.b16 %v469, %v467
        %v492 = vpack.c.b16 %v470, %v468
        %v493 = vpack.c.b16 %v473, %v471
        %v494 = vpack.c.b16 %v474, %v472
        %v495 = vpack.c.b16 %v477, %v475
        %v496 = vpack.c.b16 %v478, %v476
        %v497 = vpack.c.b16 %v481, %v479
        %v498 = vpack.c.b16 %v482, %v480
        %v547 = vunpack.c.l.b16 %v403
        %v548 = vunpack.c.l.b16 %v404
        %v549 = vunpack.c.l.b16 %v405
        %v550 = vunpack.c.l.b16 %v406
        %v551 = vunpack.c.l.b16 %v407
        %v552 = vunpack.c.l.b16 %v408
        %v553 = vunpack.c.l.b16 %v409
        %v554 = vunpack.c.l.b16 %v410
        %v555 = vunpack.c.l.b16 %v411
        %v556 = vunpack.c.l.b16 %v412
        %v557 = vunpack.c.l.b16 %v413
        %v558 = vunpack.c.l.b16 %v414
        %v559 = vunpack.c.l.b16 %v415
        %v560 = vunpack.c.l.b16 %v416
        %v561 = vunpack.c.l.b16 %v417
        %v562 = vunpack.c.l.b16 %v418
        %v563 = vunpack.c.l.b16 %v419
        %v564 = vunpack.c.l.b16 %v420
        %v565 = vunpack.c.l.b16 %v421
        %v566 = vunpack.c.l.b16 %v422
        %v567 = vunpack.c.l.b16 %v423
        %v568 = vunpack.c.l.b16 %v424
        %v569 = vunpack.c.l.b16 %v425
        %v570 = vunpack.c.l.b16 %v426
        %v571 = vunpack.c.l.b16 %v427
        %v572 = vunpack.c.l.b16 %v428
        %v573 = vunpack.c.l.b16 %v429
        %v574 = vunpack.c.l.b16 %v430
        %v575 = vunpack.c.l.b16 %v431
        %v576 = vunpack.c.l.b16 %v432
        %v577 = vunpack.c.l.b16 %v433
        %v578 = vunpack.c.l.b16 %v434
        %v579 = vpack.c.b16 %v548, %v547
        %v580 = vpack.c.b16 %v550, %v549
        %v581 = vpack.c.b16 %v552, %v551
        %v582 = vpack.c.b16 %v554, %v553
        %v583 = vpack.c.b16 %v556, %v555
        %v584 = vpack.c.b16 %v558, %v557
        %v585 = vpack.c.b16 %v560, %v559
        %v586 = vpack.c.b16 %v562, %v561
        %v587 = vpack.c.b16 %v564, %v563
        %v588 = vpack.c.b16 %v566, %v565
        %v589 = vpack.c.b16 %v568, %v567
        %v590 = vpack.c.b16 %v570, %v569
        %v591 = vpack.c.b16 %v572, %v571
        %v592 = vpack.c.b16 %v574, %v573
        %v593 = vpack.c.b16 %v576, %v575
        %v594 = vpack.c.b16 %v578, %v577
        %611 = vmatprep.subr.bf16.mxu0 0
        %612 = vmatpush1.bf16.msra.mxu0 %v579
        %613 = vmatprep.subr.bf16.mxu0 0
        %614 = vmatpush1.bf16.msra.mxu0 %v580
        %615 = vmatprep.subr.bf16.mxu0 0
        %616 = vmatpush1.bf16.msra.mxu0 %v581
        %617 = vmatprep.subr.bf16.mxu0 0
        %618 = vmatpush1.bf16.msra.mxu0 %v582
        %619 = vmatprep.subr.bf16.mxu0 0
        %620 = vmatpush1.bf16.msra.mxu0 %v583
        %621 = vmatprep.subr.bf16.mxu0 0
        %622 = vmatpush1.bf16.msra.mxu0 %v584
        %623 = vmatprep.subr.bf16.mxu0 0
        %624 = vmatpush1.bf16.msra.mxu0 %v585
        %625 = vmatprep.subr.bf16.mxu0 0
        %626 = vmatpush1.bf16.msra.mxu0 %v586
        %627 = vmatprep.subr.bf16.mxu0 0
        %628 = vmatpush1.bf16.msra.mxu0 %v587
        %629 = vmatprep.subr.bf16.mxu0 0
        %630 = vmatpush1.bf16.msra.mxu0 %v588
        %631 = vmatprep.subr.bf16.mxu0 0
        %632 = vmatpush1.bf16.msra.mxu0 %v589
        %633 = vmatprep.subr.bf16.mxu0 0
        %634 = vmatpush1.bf16.msra.mxu0 %v590
        %635 = vmatprep.subr.bf16.mxu0 0
        %636 = vmatpush1.bf16.msra.mxu0 %v591
        %637 = vmatprep.subr.bf16.mxu0 0
        %638 = vmatpush1.bf16.msra.mxu0 %v592
        %639 = vmatprep.subr.bf16.mxu0 0
        %640 = vmatpush1.bf16.msra.mxu0 %v593
        %641 = vmatprep.subr.bf16.mxu0 0
        %642 = vmatpush1.bf16.msra.mxu0 %v594
        %643 = vmatprep.mubr.bf16.mxu0 %v484
        %644 = vmatmul.mubr.bf16.gmra.mrb[0].mxu0 %v483
        %v645 = vpop.f32.mrb[0].mxu0
        %v646 = vadd.f32 0.0, %v645
        %v647 = vpop.f32.mrb[0].mxu0
        %v648 = vpop.f32.mrb[0].mxu0
        %v649 = vadd.f32 0.0, %v648
        %v650 = vpop.f32.mrb[0].mxu0
        %651 = vmatprep.mubr.bf16.mxu0 %v486
        %652 = vmatmul.mubr.bf16.gmra.mrb[0].mxu0 %v485
        %v653 = vpop.f32.mrb[0].mxu0
        %v654 = vadd.f32 0.0, %v653
        %v655 = vpop.f32.mrb[0].mxu0
        %v656 = vpop.f32.mrb[0].mxu0
        %v657 = vadd.f32 0.0, %v656
        %v658 = vpop.f32.mrb[0].mxu0
        %659 = vmatprep.mubr.bf16.mxu0 %v488
        %660 = vmatmul.mubr.bf16.gmra.mrb[0].mxu0 %v487
        %v661 = vpop.f32.mrb[0].mxu0
        %v662 = vadd.f32 0.0, %v661
        %v663 = vpop.f32.mrb[0].mxu0
        %v664 = vpop.f32.mrb[0].mxu0
        %v665 = vadd.f32 0.0, %v664
        %v666 = vpop.f32.mrb[0].mxu0
        %667 = vmatprep.mubr.bf16.mxu0 %v490
        %668 = vmatmul.mubr.bf16.gmra.mrb[0].mxu0 %v489
        %v669 = vpop.f32.mrb[0].mxu0
        %v670 = vadd.f32 0.0, %v669
        %v671 = vpop.f32.mrb[0].mxu0
        %v672 = vpop.f32.mrb[0].mxu0
        %v673 = vadd.f32 0.0, %v672
        %v674 = vpop.f32.mrb[0].mxu0
        %675 = vmatprep.mubr.bf16.mxu0 %v492
        %676 = vmatmul.mubr.bf16.gmra.mrb[0].mxu0 %v491
        %v677 = vpop.f32.mrb[0].mxu0
        %v678 = vadd.f32 0.0, %v677
        %v679 = vpop.f32.mrb[0].mxu0
        %v680 = vpop.f32.mrb[0].mxu0
        %v681 = vadd.f32 0.0, %v680
        %v682 = vpop.f32.mrb[0].mxu0
        %683 = vmatprep.mubr.bf16.mxu0 %v494
        %684 = vmatmul.mubr.bf16.gmra.mrb[0].mxu0 %v493
        %v685 = vpop.f32.mrb[0].mxu0
        %v686 = vadd.f32 0.0, %v685
        %v687 = vpop.f32.mrb[0].mxu0
        %v688 = vpop.f32.mrb[0].mxu0
        %v689 = vadd.f32 0.0, %v688
        %v690 = vpop.f32.mrb[0].mxu0
        %691 = vmatprep.mubr.bf16.mxu0 %v496
        %692 = vmatmul.mubr.bf16.gmra.mrb[0].mxu0 %v495
        %v693 = vpop.f32.mrb[0].mxu0
        %v694 = vadd.f32 0.0, %v693
        %v695 = vpop.f32.mrb[0].mxu0
        %v696 = vpop.f32.mrb[0].mxu0
        %v697 = vadd.f32 0.0, %v696
        %v698 = vpop.f32.mrb[0].mxu0
        %699 = vmatprep.mubr.bf16.mxu0 %v498
        %700 = vmatmul.mubr.bf16.gmra.mrb[0].mxu0 %v497
        %v701 = vpop.f32.mrb[0].mxu0
        %v702 = vadd.f32 0.0, %v701
        %v703 = vpop.f32.mrb[0].mxu0
        %v704 = vpop.f32.mrb[0].mxu0
        %v705 = vadd.f32 0.0, %v704
        %v706 = vpop.f32.mrb[0].mxu0
        %707 = vdwg.mxu0
        %v708 = vadd.f32 %v371, %v646
        %v709 = vadd.f32 %v372, %v649
        %v710 = vadd.f32 %v373, %v654
        %v711 = vadd.f32 %v374, %v657
        %v712 = vadd.f32 %v375, %v662
        %v713 = vadd.f32 %v376, %v665
        %v714 = vadd.f32 %v377, %v670
        %v715 = vadd.f32 %v378, %v673
        %v716 = vadd.f32 %v379, %v678
        %v717 = vadd.f32 %v380, %v681
        %v718 = vadd.f32 %v381, %v686
        %v719 = vadd.f32 %v382, %v689
        %v720 = vadd.f32 %v383, %v694
        %v721 = vadd.f32 %v384, %v697
        %v722 = vadd.f32 %v385, %v702
        %v723 = vadd.f32 %v386, %v705
        %724 = vst [vmem:[#allocation2] sm:$0xff] %v708
        %725 = vst [vmem:[#allocation2 + $0x8] sm:$0xff] %v709
        %726 = vst [vmem:[#allocation2 + $0x10] sm:$0xff] %v710
        %727 = vst [vmem:[#allocation2 + $0x18] sm:$0xff] %v711
        %728 = vst [vmem:[#allocation2 + $0x20] sm:$0xff] %v712
        %729 = vst [vmem:[#allocation2 + $0x28] sm:$0xff] %v713
        %730 = vst [vmem:[#allocation2 + $0x30] sm:$0xff] %v714
        %731 = vst [vmem:[#allocation2 + $0x38] sm:$0xff] %v715
        %732 = vst [vmem:[#allocation2 + $0x40] sm:$0xff] %v716
        %733 = vst [vmem:[#allocation2 + $0x48] sm:$0xff] %v717
        %734 = vst [vmem:[#allocation2 + $0x50] sm:$0xff] %v718
        %735 = vst [vmem:[#allocation2 + $0x58] sm:$0xff] %v719
        %736 = vst [vmem:[#allocation2 + $0x60] sm:$0xff] %v720
        %737 = vst [vmem:[#allocation2 + $0x68] sm:$0xff] %v721
        %738 = vst [vmem:[#allocation2 + $0x70] sm:$0xff] %v722
        %739 = vst [vmem:[#allocation2 + $0x78] sm:$0xff] %v723
        // Predicated region
        $region49: #{tpu_custom_call.1} parent=43 // pred_check
          %p740 = pneg %p351
        $region50: #{tpu_custom_call.1} parent=43 // pred_check_branch
          %742 = sbr.rel (%p740) target = $region52
        $region51: #{tpu_custom_call.1} parent=43 // pred_region
          %v743 = vld [vmem:[%s341] sm:$0xff]
          %v744 = vld [vmem:[%s341 + $0x8] sm:$0xff]
          %v745 = vld [vmem:[%s341 + $0x10] sm:$0xff]
          %v746 = vld [vmem:[%s341 + $0x18] sm:$0xff]
          %v747 = vld [vmem:[%s341 + $0x20] sm:$0xff]
          %v748 = vld [vmem:[%s341 + $0x28] sm:$0xff]
          %v749 = vld [vmem:[%s341 + $0x30] sm:$0xff]
          %v750 = vld [vmem:[%s341 + $0x38] sm:$0xff]
          %v751 = vld [vmem:[%s341 + $0x40] sm:$0xff]
          %v752 = vld [vmem:[%s341 + $0x48] sm:$0xff]
          %v753 = vld [vmem:[%s341 + $0x50] sm:$0xff]
          %v754 = vld [vmem:[%s341 + $0x58] sm:$0xff]
          %v755 = vld [vmem:[%s341 + $0x60] sm:$0xff]
          %v756 = vld [vmem:[%s341 + $0x68] sm:$0xff]
          %v757 = vld [vmem:[%s341 + $0x70] sm:$0xff]
          %v758 = vld [vmem:[%s341 + $0x78] sm:$0xff]
          %v759 = vld [vmem:[#allocation2] sm:$0xff]
          %v760 = vld [vmem:[#allocation2 + $0x8] sm:$0xff]
          %v761 = vld [vmem:[#allocation2 + $0x10] sm:$0xff]
          %v762 = vld [vmem:[#allocation2 + $0x18] sm:$0xff]
          %v763 = vld [vmem:[#allocation2 + $0x20] sm:$0xff]
          %v764 = vld [vmem:[#allocation2 + $0x28] sm:$0xff]
          %v765 = vld [vmem:[#allocation2 + $0x30] sm:$0xff]
          %v766 = vld [vmem:[#allocation2 + $0x38] sm:$0xff]
          %v767 = vld [vmem:[#allocation2 + $0x40] sm:$0xff]
          %v768 = vld [vmem:[#allocation2 + $0x48] sm:$0xff]
          %v769 = vld [vmem:[#allocation2 + $0x50] sm:$0xff]
          %v770 = vld [vmem:[#allocation2 + $0x58] sm:$0xff]
          %v771 = vld [vmem:[#allocation2 + $0x60] sm:$0xff]
          %v772 = vld [vmem:[#allocation2 + $0x68] sm:$0xff]
          %v773 = vld [vmem:[#allocation2 + $0x70] sm:$0xff]
          %v774 = vld [vmem:[#allocation2 + $0x78] sm:$0xff]
          %776 = vset.pattern.permute.xlu0 0
          %777 = vperm.xlu0 %776, %v743
          %v778 = vpop.permute.xlu0 %777
          %781 = vset.pattern.permute.xlu0 0
          %782 = vperm.xlu0 %781, %v744
          %v783 = vpop.permute.xlu0 %782
          %786 = vset.pattern.permute.xlu0 0
          %787 = vperm.xlu0 %786, %v745
          %v788 = vpop.permute.xlu0 %787
          %791 = vset.pattern.permute.xlu0 0
          %792 = vperm.xlu0 %791, %v746
          %v793 = vpop.permute.xlu0 %792
          %796 = vset.pattern.permute.xlu0 0
          %797 = vperm.xlu0 %796, %v747
          %v798 = vpop.permute.xlu0 %797
          %801 = vset.pattern.permute.xlu0 0
          %802 = vperm.xlu0 %801, %v748
          %v803 = vpop.permute.xlu0 %802
          %806 = vset.pattern.permute.xlu0 0
          %807 = vperm.xlu0 %806, %v749
          %v808 = vpop.permute.xlu0 %807
          %811 = vset.pattern.permute.xlu0 0
          %812 = vperm.xlu0 %811, %v750
          %v813 = vpop.permute.xlu0 %812
          %816 = vset.pattern.permute.xlu0 0
          %817 = vperm.xlu0 %816, %v751
          %v818 = vpop.permute.xlu0 %817
          %821 = vset.pattern.permute.xlu0 0
          %822 = vperm.xlu0 %821, %v752
          %v823 = vpop.permute.xlu0 %822
          %826 = vset.pattern.permute.xlu0 0
          %827 = vperm.xlu0 %826, %v753
          %v828 = vpop.permute.xlu0 %827
          %831 = vset.pattern.permute.xlu0 0
          %832 = vperm.xlu0 %831, %v754
          %v833 = vpop.permute.xlu0 %832
          %836 = vset.pattern.permute.xlu0 0
          %837 = vperm.xlu0 %836, %v755
          %v838 = vpop.permute.xlu0 %837
          %841 = vset.pattern.permute.xlu0 0
          %842 = vperm.xlu0 %841, %v756
          %v843 = vpop.permute.xlu0 %842
          %846 = vset.pattern.permute.xlu0 0
          %847 = vperm.xlu0 %846, %v757
          %v848 = vpop.permute.xlu0 %847
          %851 = vset.pattern.permute.xlu0 0
          %852 = vperm.xlu0 %851, %v758
          %v853 = vpop.permute.xlu0 %852
          %v855 = vmul.f32 %v778, %v759
          %v856 = vmul.f32 %v783, %v760
          %v857 = vmul.f32 %v788, %v761
          %v858 = vmul.f32 %v793, %v762
          %v859 = vmul.f32 %v798, %v763
          %v860 = vmul.f32 %v803, %v764
          %v861 = vmul.f32 %v808, %v765
          %v862 = vmul.f32 %v813, %v766
          %v863 = vmul.f32 %v818, %v767
          %v864 = vmul.f32 %v823, %v768
          %v865 = vmul.f32 %v828, %v769
          %v866 = vmul.f32 %v833, %v770
          %v867 = vmul.f32 %v838, %v771
          %v868 = vmul.f32 %v843, %v772
          %v869 = vmul.f32 %v848, %v773
          %v870 = vmul.f32 %v853, %v774
          %v871 = vld [vmem:[%s3] sm:$0x1]
          %v873 = vlaneseq
          %v874 = vshrl.u32 %v873, 7
          %v875 = vsub.s32 0, %v874
          %v876 = vrot.slane %v871, %v875
          %v878 = vadd.f32 %v855, %v876
          %v879 = vadd.f32 %v856, %v876
          %v880 = vadd.f32 %v857, %v876
          %v881 = vadd.f32 %v858, %v876
          %v882 = vadd.f32 %v859, %v876
          %v883 = vadd.f32 %v860, %v876
          %v884 = vadd.f32 %v861, %v876
          %v885 = vadd.f32 %v862, %v876
          %v886 = vadd.f32 %v863, %v876
          %v887 = vadd.f32 %v864, %v876
          %v888 = vadd.f32 %v865, %v876
          %v889 = vadd.f32 %v866, %v876
          %v890 = vadd.f32 %v867, %v876
          %v891 = vadd.f32 %v868, %v876
          %v892 = vadd.f32 %v869, %v876
          %v893 = vadd.f32 %v870, %v876
          %v894 = vmax.f32 %v878, 0.0
          %v895 = vmax.f32 %v879, 0.0
          %v896 = vmax.f32 %v880, 0.0
          %v897 = vmax.f32 %v881, 0.0
          %v898 = vmax.f32 %v882, 0.0
          %v899 = vmax.f32 %v883, 0.0
          %v900 = vmax.f32 %v884, 0.0
          %v901 = vmax.f32 %v885, 0.0
          %v902 = vmax.f32 %v886, 0.0
          %v903 = vmax.f32 %v887, 0.0
          %v904 = vmax.f32 %v888, 0.0
          %v905 = vmax.f32 %v889, 0.0
          %v906 = vmax.f32 %v890, 0.0
          %v907 = vmax.f32 %v891, 0.0
          %v908 = vmax.f32 %v892, 0.0
          %v909 = vmax.f32 %v893, 0.0
          %v910 = vld [vmem:[%s347] sm:$0xff]
          %v911 = vld [vmem:[%s347 + $0x8] sm:$0xff]
          %v912 = vld [vmem:[%s347 + $0x10] sm:$0xff]
          %v913 = vld [vmem:[%s347 + $0x18] sm:$0xff]
          %v914 = vld [vmem:[%s347 + $0x20] sm:$0xff]
          %v915 = vld [vmem:[%s347 + $0x28] sm:$0xff]
          %v916 = vld [vmem:[%s347 + $0x30] sm:$0xff]
          %v917 = vld [vmem:[%s347 + $0x38] sm:$0xff]
          %v918 = vld [vmem:[%s347 + $0x40] sm:$0xff]
          %v919 = vld [vmem:[%s347 + $0x48] sm:$0xff]
          %v920 = vld [vmem:[%s347 + $0x50] sm:$0xff]
          %v921 = vld [vmem:[%s347 + $0x58] sm:$0xff]
          %v922 = vld [vmem:[%s347 + $0x60] sm:$0xff]
          %v923 = vld [vmem:[%s347 + $0x68] sm:$0xff]
          %v924 = vld [vmem:[%s347 + $0x70] sm:$0xff]
          %v925 = vld [vmem:[%s347 + $0x78] sm:$0xff]
          %927 = vset.pattern.permute.xlu0 0
          %928 = vperm.xlu0 %927, %v910
          %v929 = vpop.permute.xlu0 %928
          %932 = vset.pattern.permute.xlu0 0
          %933 = vperm.xlu0 %932, %v911
          %v934 = vpop.permute.xlu0 %933
          %937 = vset.pattern.permute.xlu0 0
          %938 = vperm.xlu0 %937, %v912
          %v939 = vpop.permute.xlu0 %938
          %942 = vset.pattern.permute.xlu0 0
          %943 = vperm.xlu0 %942, %v913
          %v944 = vpop.permute.xlu0 %943
          %947 = vset.pattern.permute.xlu0 0
          %948 = vperm.xlu0 %947, %v914
          %v949 = vpop.permute.xlu0 %948
          %952 = vset.pattern.permute.xlu0 0
          %953 = vperm.xlu0 %952, %v915
          %v954 = vpop.permute.xlu0 %953
          %957 = vset.pattern.permute.xlu0 0
          %958 = vperm.xlu0 %957, %v916
          %v959 = vpop.permute.xlu0 %958
          %962 = vset.pattern.permute.xlu0 0
          %963 = vperm.xlu0 %962, %v917
          %v964 = vpop.permute.xlu0 %963
          %967 = vset.pattern.permute.xlu0 0
          %968 = vperm.xlu0 %967, %v918
          %v969 = vpop.permute.xlu0 %968
          %972 = vset.pattern.permute.xlu0 0
          %973 = vperm.xlu0 %972, %v919
          %v974 = vpop.permute.xlu0 %973
          %977 = vset.pattern.permute.xlu0 0
          %978 = vperm.xlu0 %977, %v920
          %v979 = vpop.permute.xlu0 %978
          %982 = vset.pattern.permute.xlu0 0
          %983 = vperm.xlu0 %982, %v921
          %v984 = vpop.permute.xlu0 %983
          %987 = vset.pattern.permute.xlu0 0
          %988 = vperm.xlu0 %987, %v922
          %v989 = vpop.permute.xlu0 %988
          %992 = vset.pattern.permute.xlu0 0
          %993 = vperm.xlu0 %992, %v923
          %v994 = vpop.permute.xlu0 %993
          %997 = vset.pattern.permute.xlu0 0
          %998 = vperm.xlu0 %997, %v924
          %v999 = vpop.permute.xlu0 %998
          %1002 = vset.pattern.permute.xlu0 0
          %1003 = vperm.xlu0 %1002, %v925
          %v1004 = vpop.permute.xlu0 %1003
          %v1006 = vmul.f32 %v929, %v894
          %v1007 = vmul.f32 %v934, %v895
          %v1008 = vmul.f32 %v939, %v896
          %v1009 = vmul.f32 %v944, %v897
          %v1010 = vmul.f32 %v949, %v898
          %v1011 = vmul.f32 %v954, %v899
          %v1012 = vmul.f32 %v959, %v900
          %v1013 = vmul.f32 %v964, %v901
          %v1014 = vmul.f32 %v969, %v902
          %v1015 = vmul.f32 %v974, %v903
          %v1016 = vmul.f32 %v979, %v904
          %v1017 = vmul.f32 %v984, %v905
          %v1018 = vmul.f32 %v989, %v906
          %v1019 = vmul.f32 %v994, %v907
          %v1020 = vmul.f32 %v999, %v908
          %v1021 = vmul.f32 %v1004, %v909
          %v1022 = vpack.c.bf16 %v1007, %v1006
          %v1023 = vpack.c.bf16 %v1009, %v1008
          %v1024 = vpack.c.bf16 %v1011, %v1010
          %v1025 = vpack.c.bf16 %v1013, %v1012
          %v1026 = vpack.c.bf16 %v1015, %v1014
          %v1027 = vpack.c.bf16 %v1017, %v1016
          %v1028 = vpack.c.bf16 %v1019, %v1018
          %v1029 = vpack.c.bf16 %v1021, %v1020
          %v1030 = vld [vmem:[%s5] sm:$0xf]
          %v1031 = vld [vmem:[%s5 + $0x4] sm:$0xf]
          %v1032 = vld [vmem:[%s5 + $0x8] sm:$0xf]
          %v1033 = vld [vmem:[%s5 + $0xc] sm:$0xf]
          %v1034 = vld [vmem:[%s5 + $0x10] sm:$0xf]
          %v1035 = vld [vmem:[%s5 + $0x14] sm:$0xf]
          %v1036 = vld [vmem:[%s5 + $0x18] sm:$0xf]
          %v1037 = vld [vmem:[%s5 + $0x1c] sm:$0xf]
          %v1038 = vld [vmem:[%s5 + $0x20] sm:$0xf]
          %v1039 = vld [vmem:[%s5 + $0x24] sm:$0xf]
          %v1040 = vld [vmem:[%s5 + $0x28] sm:$0xf]
          %v1041 = vld [vmem:[%s5 + $0x2c] sm:$0xf]
          %v1042 = vld [vmem:[%s5 + $0x30] sm:$0xf]
          %v1043 = vld [vmem:[%s5 + $0x34] sm:$0xf]
          %v1044 = vld [vmem:[%s5 + $0x38] sm:$0xf]
          %v1045 = vld [vmem:[%s5 + $0x3c] sm:$0xf]
          %v1062 = vunpack.c.l.b16 %v1030
          %v1063 = vunpack.c.l.b16 %v1031
          %v1064 = vunpack.c.l.b16 %v1032
          %v1065 = vunpack.c.l.b16 %v1033
          %v1066 = vunpack.c.l.b16 %v1034
          %v1067 = vunpack.c.l.b16 %v1035
          %v1068 = vunpack.c.l.b16 %v1036
          %v1069 = vunpack.c.l.b16 %v1037
          %v1070 = vunpack.c.l.b16 %v1038
          %v1071 = vunpack.c.l.b16 %v1039
          %v1072 = vunpack.c.l.b16 %v1040
          %v1073 = vunpack.c.l.b16 %v1041
          %v1074 = vunpack.c.l.b16 %v1042
          %v1075 = vunpack.c.l.b16 %v1043
          %v1076 = vunpack.c.l.b16 %v1044
          %v1077 = vunpack.c.l.b16 %v1045
          %v1078 = vpack.c.b16 %v1063, %v1062
          %v1079 = vpack.c.b16 %v1065, %v1064
          %v1080 = vpack.c.b16 %v1067, %v1066
          %v1081 = vpack.c.b16 %v1069, %v1068
          %v1082 = vpack.c.b16 %v1071, %v1070
          %v1083 = vpack.c.b16 %v1073, %v1072
          %v1084 = vpack.c.b16 %v1075, %v1074
          %v1085 = vpack.c.b16 %v1077, %v1076
          %1094 = vmatprep.subr.bf16.mxu0 0
          %1095 = vmatpush1.bf16.msra.mxu0 %v1078
          %1096 = vmatprep.subr.bf16.mxu0 0
          %1097 = vmatpush1.bf16.msra.mxu0 %v1079
          %1098 = vmatprep.subr.bf16.mxu0 0
          %1099 = vmatpush1.bf16.msra.mxu0 %v1080
          %1100 = vmatprep.subr.bf16.mxu0 0
          %1101 = vmatpush1.bf16.msra.mxu0 %v1081
          %1102 = vmatprep.subr.bf16.mxu0 0
          %1103 = vmatpush1.bf16.msra.mxu0 %v1082
          %1104 = vmatprep.subr.bf16.mxu0 0
          %1105 = vmatpush1.bf16.msra.mxu0 %v1083
          %1106 = vmatprep.subr.bf16.mxu0 0
          %1107 = vmatpush1.bf16.msra.mxu0 %v1084
          %1108 = vmatprep.subr.bf16.mxu0 0
          %1109 = vmatpush1.bf16.msra.mxu0 %v1085
          %1110 = vmatprep.subr.bf16.mxu0 0
          %1111 = vmatpush1.bf16.msra.mxu0 0
          %1112 = vmatprep.subr.bf16.mxu0 0
          %1113 = vmatpush1.bf16.msra.mxu0 0
          %1114 = vmatprep.subr.bf16.mxu0 0
          %1115 = vmatpush1.bf16.msra.mxu0 0
          %1116 = vmatprep.subr.bf16.mxu0 0
          %1117 = vmatpush1.bf16.msra.mxu0 0
          %1118 = vmatprep.subr.bf16.mxu0 0
          %1119 = vmatpush1.bf16.msra.mxu0 0
          %1120 = vmatprep.subr.bf16.mxu0 0
          %1121 = vmatpush1.bf16.msra.mxu0 0
          %1122 = vmatprep.subr.bf16.mxu0 0
          %1123 = vmatpush1.bf16.msra.mxu0 0
          %1124 = vmatprep.subr.bf16.mxu0 0
          %1125 = vmatpush1.bf16.msra.mxu0 0
          %1126 = vmatprep.mubr.bf16.mxu0 0
          %1127 = vmatmul.mubr.bf16.gmra.mrb[0].mxu0 %v1022
          %v1128 = vpop.f32.mrb[0].mxu0
          %v1129 = vadd.f32 0.0, %v1128
          %v1130 = vpop.f32.mrb[0].mxu0
          %v1131 = vpop.f32.mrb[0].mxu0
          %v1132 = vadd.f32 0.0, %v1131
          %v1133 = vpop.f32.mrb[0].mxu0
          %1134 = vmatprep.mubr.bf16.mxu0 0
          %1135 = vmatmul.mubr.bf16.gmra.mrb[0].mxu0 %v1023
          %v1136 = vpop.f32.mrb[0].mxu0
          %v1137 = vadd.f32 0.0, %v1136
          %v1138 = vpop.f32.mrb[0].mxu0
          %v1139 = vpop.f32.mrb[0].mxu0
          %v1140 = vadd.f32 0.0, %v1139
          %v1141 = vpop.f32.mrb[0].mxu0
          %1142 = vmatprep.mubr.bf16.mxu0 0
          %1143 = vmatmul.mubr.bf16.gmra.mrb[0].mxu0 %v1024
          %v1144 = vpop.f32.mrb[0].mxu0
          %v1145 = vadd.f32 0.0, %v1144
          %v1146 = vpop.f32.mrb[0].mxu0
          %v1147 = vpop.f32.mrb[0].mxu0
          %v1148 = vadd.f32 0.0, %v1147
          %v1149 = vpop.f32.mrb[0].mxu0
          %1150 = vmatprep.mubr.bf16.mxu0 0
          %1151 = vmatmul.mubr.bf16.gmra.mrb[0].mxu0 %v1025
          %v1152 = vpop.f32.mrb[0].mxu0
          %v1153 = vadd.f32 0.0, %v1152
          %v1154 = vpop.f32.mrb[0].mxu0
          %v1155 = vpop.f32.mrb[0].mxu0
          %v1156 = vadd.f32 0.0, %v1155
          %v1157 = vpop.f32.mrb[0].mxu0
          %1158 = vmatprep.mubr.bf16.mxu0 0
          %1159 = vmatmul.mubr.bf16.gmra.mrb[0].mxu0 %v1026
          %v1160 = vpop.f32.mrb[0].mxu0
          %v1161 = vadd.f32 0.0, %v1160
          %v1162 = vpop.f32.mrb[0].mxu0
          %v1163 = vpop.f32.mrb[0].mxu0
          %v1164 = vadd.f32 0.0, %v1163
          %v1165 = vpop.f32.mrb[0].mxu0
          %1166 = vmatprep.mubr.bf16.mxu0 0
          %1167 = vmatmul.mubr.bf16.gmra.mrb[0].mxu0 %v1027
          %v1168 = vpop.f32.mrb[0].mxu0
          %v1169 = vadd.f32 0.0, %v1168
          %v1170 = vpop.f32.mrb[0].mxu0
          %v1171 = vpop.f32.mrb[0].mxu0
          %v1172 = vadd.f32 0.0, %v1171
          %v1173 = vpop.f32.mrb[0].mxu0
          %1174 = vmatprep.mubr.bf16.mxu0 0
          %1175 = vmatmul.mubr.bf16.gmra.mrb[0].mxu0 %v1028
          %v1176 = vpop.f32.mrb[0].mxu0
          %v1177 = vadd.f32 0.0, %v1176
          %v1178 = vpop.f32.mrb[0].mxu0
          %v1179 = vpop.f32.mrb[0].mxu0
          %v1180 = vadd.f32 0.0, %v1179
          %v1181 = vpop.f32.mrb[0].mxu0
          %1182 = vmatprep.mubr.bf16.mxu0 0
          %1183 = vmatmul.mubr.bf16.gmra.mrb[0].mxu0 %v1029
          %v1184 = vpop.f32.mrb[0].mxu0
          %v1185 = vadd.f32 0.0, %v1184
          %v1186 = vpop.f32.mrb[0].mxu0
          %v1187 = vpop.f32.mrb[0].mxu0
          %v1188 = vadd.f32 0.0, %v1187
          %v1189 = vpop.f32.mrb[0].mxu0
          %1190 = vdwg.mxu0
          %v1191 = vpack.c.bf16 %v1132, %v1129
          %v1192 = vpack.c.bf16 %v1140, %v1137
          %v1193 = vpack.c.bf16 %v1148, %v1145
          %v1194 = vpack.c.bf16 %v1156, %v1153
          %v1195 = vpack.c.bf16 %v1164, %v1161
          %v1196 = vpack.c.bf16 %v1172, %v1169
          %v1197 = vpack.c.bf16 %v1180, %v1177
          %v1198 = vpack.c.bf16 %v1188, %v1185
          %v1207 = vunpack.c.l.b16 %v1191
          %v1208 = vunpack.c.h.b16 %v1191
          %v1209 = vunpack.c.l.b16 %v1192
          %v1210 = vunpack.c.h.b16 %v1192
          %v1211 = vunpack.c.l.b16 %v1193
          %v1212 = vunpack.c.h.b16 %v1193
          %v1213 = vunpack.c.l.b16 %v1194
          %v1214 = vunpack.c.h.b16 %v1194
          %v1215 = vunpack.c.l.b16 %v1195
          %v1216 = vunpack.c.h.b16 %v1195
          %v1217 = vunpack.c.l.b16 %v1196
          %v1218 = vunpack.c.h.b16 %v1196
          %v1219 = vunpack.c.l.b16 %v1197
          %v1220 = vunpack.c.h.b16 %v1197
          %v1221 = vunpack.c.l.b16 %v1198
          %v1222 = vunpack.c.h.b16 %v1198
          %v1223 = vpack.c.b16 %v1207, %v1207
          %v1224 = vpack.c.b16 %v1208, %v1208
          %v1225 = vpack.c.b16 %v1209, %v1209
          %v1226 = vpack.c.b16 %v1210, %v1210
          %v1227 = vpack.c.b16 %v1211, %v1211
          %v1228 = vpack.c.b16 %v1212, %v1212
          %v1229 = vpack.c.b16 %v1213, %v1213
          %v1230 = vpack.c.b16 %v1214, %v1214
          %v1231 = vpack.c.b16 %v1215, %v1215
          %v1232 = vpack.c.b16 %v1216, %v1216
          %v1233 = vpack.c.b16 %v1217, %v1217
          %v1234 = vpack.c.b16 %v1218, %v1218
          %v1235 = vpack.c.b16 %v1219, %v1219
          %v1236 = vpack.c.b16 %v1220, %v1220
          %v1237 = vpack.c.b16 %v1221, %v1221
          %v1238 = vpack.c.b16 %v1222, %v1222
          %1255 = vst [vmem:[%s318] sm:$0xf] %v1223
          %1256 = vst [vmem:[%s318 + $0x4] sm:$0xf] %v1224
          %1257 = vst [vmem:[%s318 + $0x8] sm:$0xf] %v1225
          %1258 = vst [vmem:[%s318 + $0xc] sm:$0xf] %v1226
          %1259 = vst [vmem:[%s318 + $0x10] sm:$0xf] %v1227
          %1260 = vst [vmem:[%s318 + $0x14] sm:$0xf] %v1228
          %1261 = vst [vmem:[%s318 + $0x18] sm:$0xf] %v1229
          %1262 = vst [vmem:[%s318 + $0x1c] sm:$0xf] %v1230
          %1263 = vst [vmem:[%s318 + $0x20] sm:$0xf] %v1231
          %1264 = vst [vmem:[%s318 + $0x24] sm:$0xf] %v1232
          %1265 = vst [vmem:[%s318 + $0x28] sm:$0xf] %v1233
          %1266 = vst [vmem:[%s318 + $0x2c] sm:$0xf] %v1234
          %1267 = vst [vmem:[%s318 + $0x30] sm:$0xf] %v1235
          %1268 = vst [vmem:[%s318 + $0x34] sm:$0xf] %v1236
          %1269 = vst [vmem:[%s318 + $0x38] sm:$0xf] %v1237
          %1270 = vst [vmem:[%s318 + $0x3c] sm:$0xf] %v1238
        $region52: #{tpu_custom_call.1} parent=43 // pred_fallthru
          _
        %s1271 = sand.u32 %s188, 1
        %s1272 = scalar_lea.sflag [#allocation4], %s1271
        %s1273 = sand.u32 %s188, 1
        %s1274 = smul.addr %s1273, 64
        %s1275 = scalar_lea.vmem [#allocation3], %s1274
        // Predicated region
        $region53: #{tpu_custom_call.1} parent=43 // pred_check
          %p1276 = pneg %p198
        $region54: #{tpu_custom_call.1} parent=43 // pred_check_branch
          %1278 = sbr.rel (%p1276) target = $region56
        $region55: #{tpu_custom_call.1} parent=43 // pred_region
          %s1279 = smul.u32 16, %s24
          %s1281 = ssub.s32 1024, 1024
          %1282 = vsyncadd %s1272, %s1281
          %s1283 = smul.addr %s1279, 64
          %s1284 = scalar_lea.hbm %s6, %s1283
          %s1285 = sshll.u32 %s1275, 4
          %s1286 = int_to_ptr.vmem [resolvable:$true] %s1285
          %1291 = dma.vmem_to_hbm [thread:$0]  %s1286, 1024, %s1284, %s1272, 64, 64, 4
        $region56: #{tpu_custom_call.1} parent=43 // pred_fallthru
          _
      $region44: #{tpu_custom_call.1} parent=5 // pred_fallthru
        _
      %p1292 = scmp.le.s32.totalorder 2, %s15
      // Predicated region
      $region57: #{tpu_custom_call.1} parent=5 // pred_check
        %p1293 = pneg %p1292
      $region58: #{tpu_custom_call.1} parent=5 // pred_check_branch
        %1295 = sbr.rel (%p1293) target = $region60
      $region59: #{tpu_custom_call.1} parent=5 // pred_region
        %s1296 = ssub.s32 %s15, 2
        // Predicated region
        $region61: #{tpu_custom_call.1} parent=59 // pred_check
          %p1297 = pneg %p204
        $region62: #{tpu_custom_call.1} parent=59 // pred_check_branch
          %1299 = sbr.rel (%p1297) target = $region64
        $region63: #{tpu_custom_call.1} parent=59 // pred_region
          %s1300 = sand.u32 %s189, 1
          %s1301 = scalar_lea.sflag [#allocation4], %s1300
          %s1302 = sand.u32 %s189, 1
          %s1303 = smul.addr %s1302, 64
          %s1304 = scalar_lea.vmem [#allocation3], %s1303
          %1305 = dma.done %s1301, 1024
        $region64: #{tpu_custom_call.1} parent=59 // pred_fallthru
          _
      $region60: #{tpu_custom_call.1} parent=5 // pred_fallthru
        _
    $region6: #{tpu_custom_call.1} parent=1 // loop_footer
      %s19 = sadd.s32 1, %s15
    $region7: #{tpu_custom_call.1} parent=1 // loop_footer_branch
      %14 = sbr.rel target = $region3
    $region8: #{tpu_custom_call.1} parent=1 // loop_exit
      _
    %1306 = vsyncpa [#allocation4], 1
    %s1307 = scalar_lea.sflag [#allocation4], 1
    %1308 = vsyncpa %s1307, 1

</llo_original>
